<compile_context>
chip_gen: v6e
topology: v6e:2x2x1
jax: 0.10.0
libtpu: 0.0.40
codegen_flags: <defaults>
</compile_context>

<pallas_src>
import jax
import jax.numpy as jnp
from jax.experimental import pallas as pl
from jax.experimental.pallas import tpu as pltpu

_CLAMP_MIN = 1e-12
_CLAMP_MAX = 1e12


def _center_loss_kernel(x_ref, lab_ref, xsq_ref, c_ref, csq_ref, out_ref,
                        acc_ref):
    j = pl.program_id(1)                       # class tile (innermost)
    tc = c_ref.shape[0]

    @pl.when(j == 0)
    def _init():
        acc_ref[...] = jnp.zeros_like(acc_ref)

    # Cross term on the MXU: contract the feature axis of BOTH operands
    # (native transposed-RHS matmul, no materialized centers.T).
    gram = jax.lax.dot_general(
        x_ref[...], c_ref[...],
        dimension_numbers=(((1,), (1,)), ((), ())),
        preferred_element_type=jnp.float32)                      # (tb, tc) f32

    dist = xsq_ref[...] + csq_ref[...] - 2.0 * gram              # (tb, tc) f32

    # Reference mask `labels_i == j`.  Padded rows carry label -1 and padded
    # columns have col_id >= num_classes, so neither can ever match.
    col_ids = j * tc + jax.lax.broadcasted_iota(jnp.int32, dist.shape, 1)
    own = lab_ref[...] == col_ids                                # (tb, tc)

    # Per cell of (dist * mask).clamp(1e-12, 1e12):
    #   own cell     -> clamp(dist, 1e-12, 1e12)
    #   non-own cell -> 1e-12   (padded cells included; corrected in wrapper)
    contrib = jnp.where(own, jnp.clip(dist, _CLAMP_MIN, _CLAMP_MAX),
                        jnp.float32(_CLAMP_MIN))

    # Lane reduce only per step; the sublane reduce is deferred to finalize.
    acc_ref[...] += jnp.sum(contrib, axis=1, keepdims=True)      # (tb, 1)

    @pl.when(j == pl.num_programs(1) - 1)
    def _finalize():
        total = jnp.sum(acc_ref[...], axis=0, keepdims=True)     # (1, 1)
        out_ref[...] = jnp.broadcast_to(total[None], out_ref.shape)


def _vmem_capacity_bytes():
    try:
        return int(pltpu.get_tpu_info().vmem_capacity_bytes)
    except Exception:
        return 64 * 1024 * 1024      # conservative (v7x per-core) fallback


def _pick_tb(b, cap):
    if b <= cap:
        return b
    return max(8, (cap // 8) * 8)


def _pick_tc(c, cap):
    if c <= cap:
        return c
    t = (cap // 128) * 128           # c_sq (1, tc) block needs a 128-multiple
    return t if t >= 128 else c


def _estimate_vmem_bytes(tb, tc, d, gram_bytes, centers_bufs):
    x_bufs = 2 * tb * d * gram_bytes             # double-buffered feature tile
    c_bufs = centers_bufs * tc * d * gram_bytes  # centers tile (fresh each step)
    inter = 6 * tb * tc * 4                      # f32 gram/dist/mask/contrib temps
    small = 2 * (2 * tb + tc) * 4 + tb * 4 + 2 * 8 * 128 * 4
    return x_bufs + c_bufs + inter + small


def _shrink_tiles(tb, tc):
    # Prefer shrinking the class tile: it does not increase total centers HBM
    # traffic, while a smaller batch tile does.
    if tc > 128:
        new_tc = max(128, ((tc // 2) // 128) * 128)
        if new_tc < tc:
            return tb, new_tc
    if tb > 8:
        new_tb = max(8, ((tb // 2) // 8) * 8)
        if new_tb < tb:
            return new_tb, tc
    return tb, tc


def center_loss(x, labels, centers, *, tb_max=512, tc_max=256,
                gram_dtype=None, centers_buffer_count=None):
    """JAX/Pallas equivalent of CenterLoss.forward(x, labels).

    x: (batch, feat_dim); labels: (batch,) int class ids;
    centers: (num_classes, feat_dim).
    """
    b, d = x.shape
    c, dc = centers.shape
    assert d == dc, "feature dims of x and centers must match"
    assert labels.shape[0] == b, "features.size(0) != labels.size(0)"

    # Squared norms precomputed once in f32 (review #3); streamed as tiny inputs.
    x_sq = jnp.sum(jnp.square(x.astype(jnp.float32)), axis=1, keepdims=True)   # (b, 1)
    c_sq = jnp.sum(jnp.square(centers.astype(jnp.float32)), axis=1)[None, :]   # (1, c)

    # Gram operand dtype: never promote bf16 up to f32; optionally force bf16.
    if gram_dtype is None:
        if x.dtype == jnp.bfloat16 or centers.dtype == jnp.bfloat16:
            gram_dtype = jnp.bfloat16
        else:
            gram_dtype = jnp.promote_types(x.dtype, centers.dtype)
    gram_dtype = jnp.dtype(gram_dtype)
    xg = x if x.dtype == gram_dtype else x.astype(gram_dtype)
    cg = centers if centers.dtype == gram_dtype else centers.astype(gram_dtype)

    # Tile selection against the per-generation VMEM budget (review #2/#7/#8).
    vmem_cap = _vmem_capacity_bytes()
    budget = int(0.45 * vmem_cap)
    cbufs = centers_buffer_count if centers_buffer_count is not None else 2
    tb = _pick_tb(b, tb_max)
    tc = _pick_tc(c, tc_max)
    for _ in range(32):
        if _estimate_vmem_bytes(tb, tc, d, gram_dtype.itemsize, cbufs) <= budget:
            break
        ntb, ntc = _shrink_tiles(tb, tc)
        if (ntb, ntc) == (tb, tc):
            break
        tb, tc = ntb, ntc

    nb = pl.cdiv(b, tb)
    nc = pl.cdiv(c, tc)

    # Pad labels so padded batch rows (-1) can never match any column id.
    lab = labels.astype(jnp.int32).reshape(b, 1)
    b_pad = nb * tb
    if b_pad != b:
        lab = jnp.concatenate(
            [lab, jnp.full((b_pad - b, 1), -1, jnp.int32)], axis=0)

    centers_spec_kwargs = {}
    if centers_buffer_count is not None and nc > 1:
        # Deeper pipelining of the centers stream (a fresh (tc, d) HBM fetch
        # happens every grid step with class innermost).
        centers_spec_kwargs["pipeline_mode"] = pl.Buffered(centers_buffer_count)
    centers_spec = pl.BlockSpec((tc, d), lambda i, j: (j, 0),
                                **centers_spec_kwargs)

    est = _estimate_vmem_bytes(tb, tc, d, gram_dtype.itemsize, cbufs)
    vmem_limit = int(min(0.9 * vmem_cap, max(2 * est, 32 * 1024 * 1024)))

    out = pl.pallas_call(
        _center_loss_kernel,
        out_shape=jax.ShapeDtypeStruct((nb, 8, 128), jnp.float32),
        grid_spec=pltpu.PrefetchScalarGridSpec(
            num_scalar_prefetch=0,
            grid=(nb, nc),
            in_specs=[
                pl.BlockSpec((tb, d), lambda i, j: (i, 0)),   # features
                pl.BlockSpec((tb, 1), lambda i, j: (i, 0)),   # labels (padded)
                pl.BlockSpec((tb, 1), lambda i, j: (i, 0)),   # ||x||^2
                centers_spec,                                 # class centers
                pl.BlockSpec((1, tc), lambda i, j: (0, j)),   # ||c||^2 row
            ],
            out_specs=pl.BlockSpec((1, 8, 128), lambda i, j: (i, 0, 0)),
            scratch_shapes=[pltpu.VMEM((tb, 1), jnp.float32)],
        ),
        compiler_params=pltpu.CompilerParams(
            # Batch tiles are independent -> "parallel" lets v7x megacore use
            # both TensorCores; the class axis accumulates -> "arbitrary".
            dimension_semantics=("parallel", "arbitrary"),
            vmem_limit_bytes=vmem_limit,
        ),
    )(xg, lab, x_sq, cg, c_sq)

    partials = out[:, 0, 0]                                      # (nb,) f32
    # The kernel charged 1e-12 to every non-own cell of the padded
    # (nb*tb) x (nc*tc) grid; the reference only has b*c cells.
    correction = (float(nb * tb) * float(nc * tc)
                  - float(b) * float(c)) * _CLAMP_MIN
    return (jnp.sum(partials) - jnp.float32(correction)) / jnp.float32(b)


def _reference_center_loss(x, labels, centers):
    """Pure-JAX mirror of the PyTorch forward (f32, exact matmul)."""
    with jax.default_matmul_precision("highest"):
        xf = x.astype(jnp.float32)
        cf = centers.astype(jnp.float32)
        b = xf.shape[0]
        nc = cf.shape[0]
        distmat = (jnp.sum(xf * xf, axis=1, keepdims=True)
                   + jnp.sum(cf * cf, axis=1, keepdims=True).T
                   - 2.0 * xf @ cf.T)
        mask = labels[:, None] == jnp.arange(nc, dtype=labels.dtype)[None, :]
        dist = distmat * mask.astype(jnp.float32)
        return jnp.sum(jnp.clip(dist, _CLAMP_MIN, _CLAMP_MAX)) / b


if __name__ == "__main__":
    key = jax.random.PRNGKey(0)
    kx, kc, kl, kx2, kc2, kl2 = jax.random.split(key, 6)

    # Case 1: single-block path (tiles cover the full problem), f32 gram.
    B, D, C = 32, 256, 64
    x = jax.random.normal(kx, (B, D), dtype=jnp.float32)
    centers = jax.random.normal(kc, (C, D), dtype=jnp.float32)
    labels = jax.random.randint(kl, (B,), 0, C, dtype=jnp.int32)

    ref = _reference_center_loss(x, labels, centers)
    loss = center_loss(x, labels, centers)
    jax.block_until_ready(loss)
    assert jnp.allclose(loss, ref, rtol=1e-4, atol=1e-4), (loss, ref)

    # Case 2: tiled + ragged path: grid (2, 2) with padded rows AND columns.
    # Exercises the per-batch-tile accumulator, -1 label padding and the
    # wrapper's analytic 1e-12 correction.
    B2, D2, C2 = 20, 128, 160
    x2 = jax.random.normal(kx2, (B2, D2), dtype=jnp.float32)
    centers2 = jax.random.normal(kc2, (C2, D2), dtype=jnp.float32)
    labels2 = jax.random.randint(kl2, (B2,), 0, C2, dtype=jnp.int32)
    ref2 = _reference_center_loss(x2, labels2, centers2)
    loss2 = center_loss(x2, labels2, centers2, tb_max=16, tc_max=128)
    jax.block_until_ready(loss2)
    assert jnp.allclose(loss2, ref2, rtol=1e-4, atol=1e-4), (loss2, ref2)

    # Case 3: bf16 gram (halved centers DMA, native MXU); norms stay f32.
    loss_bf16 = center_loss(x, labels, centers, gram_dtype=jnp.bfloat16)
    jax.block_until_ready(loss_bf16)
    assert jnp.allclose(loss_bf16, ref, rtol=1e-2, atol=1e-2), (loss_bf16, ref)

    print("KERNEL_OK")
</pallas_src>

<mosaic_0001>
module attributes {stable_mosaic.version = 11 : i64} {
  func.func @_center_loss_kernel(%arg0: i32, %arg1: i32, %arg2: memref<32x256xf32, #tpu.memory_space<vmem>>, %arg3: memref<32x1xi32, #tpu.memory_space<vmem>>, %arg4: memref<32x1xf32, #tpu.memory_space<vmem>>, %arg5: memref<64x256xf32, #tpu.memory_space<vmem>>, %arg6: memref<1x64xf32, #tpu.memory_space<vmem>>, %arg7: memref<1x8x128xf32, #tpu.memory_space<vmem>>, %arg8: memref<32x1xf32, #tpu.memory_space<vmem>>) attributes {dimension_semantics = [#tpu.dimension_semantics<parallel>, #tpu.dimension_semantics<arbitrary>], iteration_bounds = array<i64: 1, 1>, scalar_prefetch = 0 : i64, scratch_operands = 1 : i64, tpu.core_type = #tpu.core_type<tc>, window_params = [{transform_indices = @transform_0, window_bounds = array<i64: 32, 256>}, {transform_indices = @transform_1, window_bounds = array<i64: 32, 1>}, {transform_indices = @transform_2, window_bounds = array<i64: 32, 1>}, {transform_indices = @transform_3, window_bounds = array<i64: 64, 256>}, {transform_indices = @transform_4, window_bounds = array<i64: 1, 64>}, {transform_indices = @transform_5, window_bounds = array<i64: 1, 8, 128>}]} {
    %c0_i32 = arith.constant 0 : i32
    %0 = arith.cmpi eq, %arg1, %c0_i32 : i32
    %1 = arith.extui %0 : i1 to i32
    %c0_i32_0 = arith.constant 0 : i32
    %2 = arith.cmpi ne, %1, %c0_i32_0 : i32
    scf.if %2 {
      %cst_21 = arith.constant 0.000000e+00 : f32
      %35 = vector.broadcast %cst_21 : f32 to vector<32x1xf32>
      %c0_22 = arith.constant 0 : index
      %c0_23 = arith.constant 0 : index
      %36 = vector.load %arg8[%c0_22, %c0_23] : memref<32x1xf32, #tpu.memory_space<vmem>>, vector<32x1xf32>
      tpu.vector_store %arg8[%c0_22, %c0_23], %35 {strides = array<i32>} : memref<32x1xf32, #tpu.memory_space<vmem>>, vector<32x1xf32>,
    } else {
    }
    %c0 = arith.constant 0 : index
    %c0_1 = arith.constant 0 : index
    %3 = vector.load %arg2[%c0, %c0_1] : memref<32x256xf32, #tpu.memory_space<vmem>>, vector<32x256xf32>
    %c0_2 = arith.constant 0 : index
    %c0_3 = arith.constant 0 : index
    %4 = vector.load %arg5[%c0_2, %c0_3] : memref<64x256xf32, #tpu.memory_space<vmem>>, vector<64x256xf32>
    %cst = arith.constant dense<0.000000e+00> : vector<32x64xf32>
    %5 = tpu.matmul %3, %4, %cst {dimension_numbers = #tpu.dot_dimension_numbers<[1], [1], [0], [0], [0, 0, 1, 0], [], []>} : vector<32x256xf32>, vector<64x256xf32>, vector<32x64xf32> -> vector<32x64xf32>
    %c0_4 = arith.constant 0 : index
    %c0_5 = arith.constant 0 : index
    %6 = vector.load %arg4[%c0_4, %c0_5] : memref<32x1xf32, #tpu.memory_space<vmem>>, vector<32x1xf32>
    %c0_6 = arith.constant 0 : index
    %c0_7 = arith.constant 0 : index
    %7 = vector.load %arg6[%c0_6, %c0_7] : memref<1x64xf32, #tpu.memory_space<vmem>>, vector<1x64xf32>
    %8 = vector.broadcast %6 : vector<32x1xf32> to vector<32x64xf32>
    %9 = vector.broadcast %7 : vector<1x64xf32> to vector<32x64xf32>
    %10 = arith.addf %8, %9 : vector<32x64xf32>
    %cst_8 = arith.constant 2.000000e+00 : f32
    %11 = vector.broadcast %cst_8 : f32 to vector<32x64xf32>
    %12 = arith.mulf %11, %5 : vector<32x64xf32>
    %13 = arith.subf %10, %12 : vector<32x64xf32>
    %c64_i32 = arith.constant 64 : i32
    %14 = arith.muli %arg1, %c64_i32 : i32
    %15 = tpu.iota {dimensions = array<i32: 1>} : vector<32x64xi32>
    %16 = vector.broadcast %14 : i32 to vector<32x64xi32>
    %17 = arith.addi %16, %15 : vector<32x64xi32>
    %c0_9 = arith.constant 0 : index
    %c0_10 = arith.constant 0 : index
    %18 = vector.load %arg3[%c0_9, %c0_10] : memref<32x1xi32, #tpu.memory_space<vmem>>, vector<32x1xi32>
    %19 = vector.broadcast %18 : vector<32x1xi32> to vector<32x64xi32>
    %20 = arith.cmpi eq, %19, %17 : vector<32x64xi32>
    %cst_11 = arith.constant 9.99999996E-13 : f32
    %cst_12 = arith.constant 9.99999995E+11 : f32
    %21 = vector.broadcast %cst_11 : f32 to vector<32x64xf32>
    %22 = arith.maximumf %21, %13 : vector<32x64xf32>
    %23 = vector.broadcast %cst_12 : f32 to vector<32x64xf32>
    %24 = arith.minimumf %23, %22 : vector<32x64xf32>
    %cst_13 = arith.constant 9.99999996E-13 : f32
    %25 = vector.broadcast %cst_13 : f32 to vector<32x64xf32>
    %26 = arith.select %20, %24, %25 : vector<32x64xi1>, vector<32x64xf32>
    %c0_14 = arith.constant 0 : index
    %c0_15 = arith.constant 0 : index
    %27 = vector.load %arg8[%c0_14, %c0_15] : memref<32x1xf32, #tpu.memory_space<vmem>>, vector<32x1xf32>
    %cst_16 = arith.constant dense<0.000000e+00> : vector<32xf32>
    %28 = vector.multi_reduction <add>, %26, %cst_16 [1] : vector<32x64xf32> to vector<32xf32>
    %29 = vector.shape_cast %28 : vector<32xf32> to vector<32x1xf32>
    %30 = arith.addf %27, %29 : vector<32x1xf32>
    %c0_17 = arith.constant 0 : index
    %c0_18 = arith.constant 0 : index
    %31 = vector.load %arg8[%c0_17, %c0_18] : memref<32x1xf32, #tpu.memory_space<vmem>>, vector<32x1xf32>
    tpu.vector_store %arg8[%c0_17, %c0_18], %30 {strides = array<i32>} : memref<32x1xf32, #tpu.memory_space<vmem>>, vector<32x1xf32>,
    %c0_i32_19 = arith.constant 0 : i32
    %32 = arith.cmpi eq, %arg1, %c0_i32_19 : i32
    %33 = arith.extui %32 : i1 to i32
    %c0_i32_20 = arith.constant 0 : i32
    %34 = arith.cmpi ne, %33, %c0_i32_20 : i32
    scf.if %34 {
      %c0_21 = arith.constant 0 : index
      %c0_22 = arith.constant 0 : index
      %35 = vector.load %arg8[%c0_21, %c0_22] : memref<32x1xf32, #tpu.memory_space<vmem>>, vector<32x1xf32>
      %cst_23 = arith.constant dense<0.000000e+00> : vector<1xf32>
      %36 = vector.multi_reduction <add>, %35, %cst_23 [0] : vector<32x1xf32> to vector<1xf32>
      %37 = vector.shape_cast %36 : vector<1xf32> to vector<1x1xf32>
      %38 = vector.shape_cast %37 : vector<1x1xf32> to vector<1x1x1xf32>
      %39 = vector.shape_cast %38 : vector<1x1x1xf32> to vector<1x1x1xf32>
      %40 = vector.broadcast %39 : vector<1x1x1xf32> to vector<1x8x128xf32>
      %c0_24 = arith.constant 0 : index
      %c0_25 = arith.constant 0 : index
      %c0_26 = arith.constant 0 : index
      %41 = vector.load %arg7[%c0_24, %c0_25, %c0_26] : memref<1x8x128xf32, #tpu.memory_space<vmem>>, vector<1x8x128xf32>
      tpu.vector_store %arg7[%c0_24, %c0_25, %c0_26], %40 {strides = array<i32>} : memref<1x8x128xf32, #tpu.memory_space<vmem>>, vector<1x8x128xf32>,
    } else {
    }
    return
  }
  func.func @transform_0(%arg0: i32, %arg1: i32) -> (i32, i32) {
    %c0_i32 = arith.constant 0 : i32
    %c0_i32_0 = arith.constant 0 : i32
    return %arg0, %c0_i32 : i32, i32
  }
  func.func @transform_1(%arg0: i32, %arg1: i32) -> (i32, i32) {
    %c0_i32 = arith.constant 0 : i32
    %c0_i32_0 = arith.constant 0 : i32
    return %arg0, %c0_i32 : i32, i32
  }
  func.func @transform_2(%arg0: i32, %arg1: i32) -> (i32, i32) {
    %c0_i32 = arith.constant 0 : i32
    %c0_i32_0 = arith.constant 0 : i32
    return %arg0, %c0_i32 : i32, i32
  }
  func.func @transform_3(%arg0: i32, %arg1: i32) -> (i32, i32) {
    %c0_i32 = arith.constant 0 : i32
    %c0_i32_0 = arith.constant 0 : i32
    return %arg1, %c0_i32 : i32, i32
  }
  func.func @transform_4(%arg0: i32, %arg1: i32) -> (i32, i32) {
    %c0_i32 = arith.constant 0 : i32
    %c0_i32_0 = arith.constant 0 : i32
    return %c0_i32, %arg1 : i32, i32
  }
  func.func @transform_5(%arg0: i32, %arg1: i32) -> (i32, i32, i32) {
    %c0_i32 = arith.constant 0 : i32
    %c0_i32_0 = arith.constant 0 : i32
    %c0_i32_1 = arith.constant 0 : i32
    return %arg0, %c0_i32, %c0_i32_0 : i32, i32, i32
  }
}

</mosaic_0001>

<llo_original>
// kernel: tpu_custom_call.1
$region0: #{tpu_custom_call.1}
  #allocation0 [shape = 'u32[]', space=smem, size = 0x4, offset = 0x4, fixed_abs, tag = 'smem constant byte address 0x4 - core index']
  #allocation1 [shape = 'u32[144,128]{1,0:T(1,128)}', space=vmem, size = 0x12000, scoped, tag = 'internal scratch']
  #allocation2 [shape = 'f32[32,1]{1,0:T(8,128)}', space=vmem, size = 0x4000, scoped, tag = 'scratch operand']
  %s0 = inlined_call_operand.vmem [shape: f32[32,256], index: 0, kind: input, shape index: {}]
  %s1 = inlined_call_operand.vmem [shape: s32[32,1], index: 1, kind: input, shape index: {}]
  %s2 = inlined_call_operand.vmem [shape: f32[32,1], index: 2, kind: input, shape index: {}]
  %s3 = inlined_call_operand.hbm [shape: f32[64,256], index: 3, kind: input, shape index: {}]
  %s4 = inlined_call_operand.vmem [shape: f32[1,64], index: 4, kind: input, shape index: {}]
  %s5 = inlined_call_operand.hbm [shape: f32[1,8,128], index: 5, kind: output, shape index: {}]
  %s6 = sld [smem:[#allocation0]]
  $region42: #{tpu_custom_call.1} parent=0
    _
  %s8 = ssub.s32 1, %s6
  %s9 = scalar_select 0, %s8, %s6
  $region1: #{tpu_custom_call.1} parent=0
    #allocation3 [shape = 'u8[65536]{0}', space=vmem, size = 0x10000, scoped, tag = 'input window, operand 3, single buffered']
    #allocation4 [shape = 's32[1]{0}', space=sflag, size = 0x4, scoped, tag = 'scoped memory for tpu_custom_call.1']
    #allocation5 [shape = 's32[1]{0}', space=sflag, size = 0x4, scoped, tag = 'scoped memory for tpu_custom_call.1']
    #allocation6 [shape = 'u8[4096]{0}', space=vmem, size = 0x1000, scoped, tag = 'output window, operand 0, single buffered']
    %10 = vsyncpa [#allocation4], 0
    %11 = vsyncpa [#allocation5], 0
    // Predicated region
    $region2: #{tpu_custom_call.1} parent=1 // pred_check
      _
    $region3: #{tpu_custom_call.1} parent=1 // pred_check_branch
      %13 = sbr.rel (0) target = $region5
    $region4: #{tpu_custom_call.1} parent=1 // pred_region
      _
    $region5: #{tpu_custom_call.1} parent=1 // pred_fallthru
      _
    // Predicated region
    $region6: #{tpu_custom_call.1} parent=1 // pred_check
      _
    $region7: #{tpu_custom_call.1} parent=1 // pred_check_branch
      %15 = sbr.rel (0) target = $region9
    $region8: #{tpu_custom_call.1} parent=1 // pred_region
      _
    $region9: #{tpu_custom_call.1} parent=1 // pred_fallthru
      _
    // Predicated region
    $region10: #{tpu_custom_call.1} parent=1 // pred_check
      _
    $region11: #{tpu_custom_call.1} parent=1 // pred_check_branch
      %17 = sbr.rel (0) target = $region13
    $region12: #{tpu_custom_call.1} parent=1 // pred_region
      _
    $region13: #{tpu_custom_call.1} parent=1 // pred_fallthru
      _
    // Predicated region
    $region14: #{tpu_custom_call.1} parent=1 // pred_check
      _
    $region15: #{tpu_custom_call.1} parent=1 // pred_check_branch
      %19 = sbr.rel (0) target = $region17
    $region16: #{tpu_custom_call.1} parent=1 // pred_region
      %s21 = ssub.s32 2048, 2048
      %22 = vsyncadd [#allocation4], %s21
      %s23 = sshll.u32 [#allocation3], 4
      %s24 = int_to_ptr.vmem [resolvable:$true] %s23
      %29 = dma.hbm_to_vmem [thread:$0]  %s3, 2048, %s24, [#allocation4], 256, 256, 16
    $region17: #{tpu_custom_call.1} parent=1 // pred_fallthru
      _
    // Predicated region
    $region18: #{tpu_custom_call.1} parent=1 // pred_check
      _
    $region19: #{tpu_custom_call.1} parent=1 // pred_check_branch
      %31 = sbr.rel (0) target = $region21
    $region20: #{tpu_custom_call.1} parent=1 // pred_region
      _
    $region21: #{tpu_custom_call.1} parent=1 // pred_fallthru
      _
    // Predicated region
    $region22: #{tpu_custom_call.1} parent=1 // pred_check
      _
    $region23: #{tpu_custom_call.1} parent=1 // pred_check_branch
      %33 = sbr.rel (0) target = $region25
    $region24: #{tpu_custom_call.1} parent=1 // pred_region
      %34 = dma.done [#allocation4], 2048
    $region25: #{tpu_custom_call.1} parent=1 // pred_fallthru
      _
    %p35 = scmp.eq.s32.totalorder 0, 0
    // Predicated region
    $region26: #{tpu_custom_call.1} parent=1 // pred_check
      %p36 = pneg %p35
    $region27: #{tpu_custom_call.1} parent=1 // pred_check_branch
      %38 = sbr.rel (%p36) target = $region29
    $region28: #{tpu_custom_call.1} parent=1 // pred_region
      %vm39 = vcmask 7168
      %40 = vst.msk [vmem:[#allocation2] sm:$0xff] %vm39, 0.0
      %41 = vst.msk [vmem:[#allocation2 + $0x8] sm:$0xff] %vm39, 0.0
      %42 = vst.msk [vmem:[#allocation2 + $0x10] sm:$0xff] %vm39, 0.0
      %43 = vst.msk [vmem:[#allocation2 + $0x18] sm:$0xff] %vm39, 0.0
    $region29: #{tpu_custom_call.1} parent=1 // pred_fallthru
      _
    %v44 = vld [vmem:[%s0] sm:$0xff]
    %v45 = vld [vmem:[%s0 + $0x8] sm:$0xff]
    %v46 = vld [vmem:[%s0 + $0x10] sm:$0xff]
    %v47 = vld [vmem:[%s0 + $0x18] sm:$0xff]
    %v48 = vld [vmem:[%s0 + $0x20] sm:$0xff]
    %v49 = vld [vmem:[%s0 + $0x28] sm:$0xff]
    %v50 = vld [vmem:[%s0 + $0x30] sm:$0xff]
    %v51 = vld [vmem:[%s0 + $0x38] sm:$0xff]
    %v52 = vld [vmem:[#allocation3] sm:$0xff]
    %v53 = vld [vmem:[#allocation3 + $0x8] sm:$0xff]
    %v54 = vld [vmem:[#allocation3 + $0x10] sm:$0xff]
    %v55 = vld [vmem:[#allocation3 + $0x18] sm:$0xff]
    %v56 = vld [vmem:[#allocation3 + $0x20] sm:$0xff]
    %v57 = vld [vmem:[#allocation3 + $0x28] sm:$0xff]
    %v58 = vld [vmem:[#allocation3 + $0x30] sm:$0xff]
    %v59 = vld [vmem:[#allocation3 + $0x38] sm:$0xff]
    %v60 = vld [vmem:[#allocation3 + $0x40] sm:$0xff]
    %v61 = vld [vmem:[#allocation3 + $0x48] sm:$0xff]
    %v62 = vld [vmem:[#allocation3 + $0x50] sm:$0xff]
    %v63 = vld [vmem:[#allocation3 + $0x58] sm:$0xff]
    %v64 = vld [vmem:[#allocation3 + $0x60] sm:$0xff]
    %v65 = vld [vmem:[#allocation3 + $0x68] sm:$0xff]
    %v66 = vld [vmem:[#allocation3 + $0x70] sm:$0xff]
    %v67 = vld [vmem:[#allocation3 + $0x78] sm:$0xff]
    %68 = vmatprep.subr.mxu0 0.0
    %69 = vmatpush1.xpose.msra.mxu0 0.0
    %70 = vmatprep.subr.mxu0 0.0
    %71 = vmatpush1.xpose.msra.mxu0 0.0
    %72 = vmatprep.subr.mxu0 0.0
    %73 = vmatpush1.xpose.msra.mxu0 0.0
    %74 = vmatprep.subr.mxu0 0.0
    %75 = vmatpush1.xpose.msra.mxu0 0.0
    %76 = vmatprep.subr.mxu0 0.0
    %77 = vmatpush1.xpose.msra.mxu0 0.0
    %78 = vmatprep.subr.mxu0 0.0
    %79 = vmatpush1.xpose.msra.mxu0 0.0
    %80 = vmatprep.subr.mxu0 0.0
    %81 = vmatpush1.xpose.msra.mxu0 0.0
    %82 = vmatprep.subr.mxu0 0.0
    %83 = vmatpush1.xpose.msra.mxu0 0.0
    %84 = vmatprep.subr.mxu0 %v67
    %85 = vmatpush1.xpose.msra.mxu0 %v66
    %86 = vmatprep.subr.mxu0 %v65
    %87 = vmatpush1.xpose.msra.mxu0 %v64
    %88 = vmatprep.subr.mxu0 %v63
    %89 = vmatpush1.xpose.msra.mxu0 %v62
    %90 = vmatprep.subr.mxu0 %v61
    %91 = vmatpush1.xpose.msra.mxu0 %v60
    %92 = vmatprep.subr.mxu0 %v59
    %93 = vmatpush1.xpose.msra.mxu0 %v58
    %94 = vmatprep.subr.mxu0 %v57
    %95 = vmatpush1.xpose.msra.mxu0 %v56
    %96 = vmatprep.subr.mxu0 %v55
    %97 = vmatpush1.xpose.msra.mxu0 %v54
    %98 = vmatprep.subr.mxu0 %v53
    %99 = vmatpush1.xpose.msra.mxu0 %v52
    %100 = vmatprep.subr.mxu0 0.0
    %101 = vmatpush2.xpose.msra.mxu0 0.0
    %102 = vmatprep.subr.mxu0 0.0
    %103 = vmatpush2.xpose.msra.mxu0 0.0
    %104 = vmatprep.subr.mxu0 0.0
    %105 = vmatpush2.xpose.msra.mxu0 0.0
    %106 = vmatprep.subr.mxu0 0.0
    %107 = vmatpush2.xpose.msra.mxu0 0.0
    %108 = vmatprep.subr.mxu0 0.0
    %109 = vmatpush2.xpose.msra.mxu0 0.0
    %110 = vmatprep.subr.mxu0 0.0
    %111 = vmatpush2.xpose.msra.mxu0 0.0
    %112 = vmatprep.subr.mxu0 0.0
    %113 = vmatpush2.xpose.msra.mxu0 0.0
    %114 = vmatprep.subr.mxu0 0.0
    %115 = vmatpush2.xpose.msra.mxu0 0.0
    %116 = vmatprep.subr.mxu0 0.0
    %117 = vmatpush2.xpose.msra.mxu0 0.0
    %118 = vmatprep.subr.mxu0 0.0
    %119 = vmatpush2.xpose.msra.mxu0 0.0
    %120 = vmatprep.subr.mxu0 0.0
    %121 = vmatpush2.xpose.msra.mxu0 0.0
    %122 = vmatprep.subr.mxu0 0.0
    %123 = vmatpush2.xpose.msra.mxu0 0.0
    %124 = vmatprep.subr.mxu0 0.0
    %125 = vmatpush2.xpose.msra.mxu0 0.0
    %126 = vmatprep.subr.mxu0 0.0
    %127 = vmatpush2.xpose.msra.mxu0 0.0
    %128 = vmatprep.subr.mxu0 0.0
    %129 = vmatpush2.xpose.msra.mxu0 0.0
    %130 = vmatprep.subr.mxu0 0.0
    %131 = vmatpush2.xpose.msra.mxu0 0.0
    %132 = vmatprep.mubr.f32.mxu0 %v45
    %133 = vmatmul.mubr.f32.gmra.mxu0 %v44
    %v134 = vpop.f32.mrf.mxu0
    %v135 = vadd.f32 0.0, %v134
    %v136 = vpop.f32.mrf.mxu0
    %137 = vmatprep.mubr.f32.mxu0 %v47
    %138 = vmatmul.mubr.f32.gmra.mxu0 %v46
    %v139 = vpop.f32.mrf.mxu0
    %v140 = vadd.f32 0.0, %v139
    %v141 = vpop.f32.mrf.mxu0
    %142 = vmatprep.mubr.f32.mxu0 %v49
    %143 = vmatmul.mubr.f32.gmra.mxu0 %v48
    %v144 = vpop.f32.mrf.mxu0
    %v145 = vadd.f32 0.0, %v144
    %v146 = vpop.f32.mrf.mxu0
    %147 = vmatprep.mubr.f32.mxu0 %v51
    %148 = vmatmul.mubr.f32.gmra.mxu0 %v50
    %v149 = vpop.f32.mrf.mxu0
    %v150 = vadd.f32 0.0, %v149
    %v151 = vpop.f32.mrf.mxu0
    %152 = vdwg.mxu0
    %v153 = vld [vmem:[%s2] sm:$0xff]
    %v154 = vld [vmem:[%s2 + $0x8] sm:$0xff]
    %v155 = vld [vmem:[%s2 + $0x10] sm:$0xff]
    %v156 = vld [vmem:[%s2 + $0x18] sm:$0xff]
    %v157 = vld [vmem:[%s4] sm:$0x1]
    %159 = vset.pattern.permute.xlu0 0
    %160 = vperm.xlu0 %159, %v153
    %v161 = vpop.permute.xlu0 %160
    %164 = vset.pattern.permute.xlu0 0
    %165 = vperm.xlu0 %164, %v154
    %v166 = vpop.permute.xlu0 %165
    %169 = vset.pattern.permute.xlu0 0
    %170 = vperm.xlu0 %169, %v155
    %v171 = vpop.permute.xlu0 %170
    %174 = vset.pattern.permute.xlu0 0
    %175 = vperm.xlu0 %174, %v156
    %v176 = vpop.permute.xlu0 %175
    %v179 = vlaneseq
    %v180 = vshrl.u32 %v179, 7
    %v181 = vsub.s32 0, %v180
    %v182 = vrot.slane %v157, %v181
    %v184 = vadd.f32 %v161, %v182
    %v185 = vadd.f32 %v166, %v182
    %v186 = vadd.f32 %v171, %v182
    %v187 = vadd.f32 %v176, %v182
    %v188 = vmul.f32 %v135, 2.0
    %v189 = vmul.f32 %v140, 2.0
    %v190 = vmul.f32 %v145, 2.0
    %v191 = vmul.f32 %v150, 2.0
    %v192 = vsub.f32 %v184, %v188
    %v193 = vsub.f32 %v185, %v189
    %v194 = vsub.f32 %v186, %v190
    %v195 = vsub.f32 %v187, %v191
    %s196 = smul.u32 0, 64
    %v197 = vlaneseq
    %v198 = vand.u32 %v197, 127
    %v199 = vstv %s196
    %v200 = vadd.s32 %v199, %v198
    %v201 = vld [vmem:[%s1] sm:$0xff]
    %v202 = vld [vmem:[%s1 + $0x8] sm:$0xff]
    %v203 = vld [vmem:[%s1 + $0x10] sm:$0xff]
    %v204 = vld [vmem:[%s1 + $0x18] sm:$0xff]
    %205 = vset.pattern.permute.xlu0 0
    %206 = vperm.xlu0 %205, %v201
    %v207 = vpop.permute.xlu0 %206
    %208 = vset.pattern.permute.xlu0 0
    %209 = vperm.xlu0 %208, %v202
    %v210 = vpop.permute.xlu0 %209
    %211 = vset.pattern.permute.xlu0 0
    %212 = vperm.xlu0 %211, %v203
    %v213 = vpop.permute.xlu0 %212
    %214 = vset.pattern.permute.xlu0 0
    %215 = vperm.xlu0 %214, %v204
    %v216 = vpop.permute.xlu0 %215
    %vm217 = vcmp.eq.s32.totalorder %v207, %v200
    %vm218 = vcmp.eq.s32.totalorder %v210, %v200
    %vm219 = vcmp.eq.s32.totalorder %v213, %v200
    %vm220 = vcmp.eq.s32.totalorder %v216, %v200
    %v221 = vmax.f32 %v192, 1e-12
    %v222 = vmax.f32 %v193, 1e-12
    %v223 = vmax.f32 %v194, 1e-12
    %v224 = vmax.f32 %v195, 1e-12
    %v225 = vmin.f32 %v221, 1e+12
    %v226 = vmin.f32 %v222, 1e+12
    %v227 = vmin.f32 %v223, 1e+12
    %v228 = vmin.f32 %v224, 1e+12
    %v229 = vsel %vm217, %v225, 1e-12
    %v230 = vsel %vm218, %v226, 1e-12
    %v231 = vsel %vm219, %v227, 1e-12
    %v232 = vsel %vm220, %v228, 1e-12
    %v233 = vld [vmem:[#allocation2] sm:$0xff]
    %v234 = vld [vmem:[#allocation2 + $0x8] sm:$0xff]
    %v235 = vld [vmem:[#allocation2 + $0x10] sm:$0xff]
    %v236 = vld [vmem:[#allocation2 + $0x18] sm:$0xff]
    %vm237 = vcmask 523264
    %v238 = vsel %vm237, %v229, 0.0
    %239 = vadd.xlane.f32.xlu0 %v238
    %v240 = vpop.xlane.xlu0 %239
    %v241 = vsel %vm237, %v230, 0.0
    %242 = vadd.xlane.f32.xlu0 %v241
    %v243 = vpop.xlane.xlu0 %242
    %v244 = vsel %vm237, %v231, 0.0
    %245 = vadd.xlane.f32.xlu0 %v244
    %v246 = vpop.xlane.xlu0 %245
    %v247 = vsel %vm237, %v232, 0.0
    %248 = vadd.xlane.f32.xlu0 %v247
    %v249 = vpop.xlane.xlu0 %248
    %v250 = vadd.f32 %v233, %v240
    %v251 = vadd.f32 %v234, %v243
    %v252 = vadd.f32 %v235, %v246
    %v253 = vadd.f32 %v236, %v249
    %vm254 = vcmask 7168
    %255 = vst.msk [vmem:[#allocation2] sm:$0xff] %vm254, %v250
    %256 = vst.msk [vmem:[#allocation2 + $0x8] sm:$0xff] %vm254, %v251
    %257 = vst.msk [vmem:[#allocation2 + $0x10] sm:$0xff] %vm254, %v252
    %258 = vst.msk [vmem:[#allocation2 + $0x18] sm:$0xff] %vm254, %v253
    // Predicated region
    $region30: #{tpu_custom_call.1} parent=1 // pred_check
      %p259 = pneg %p35
    $region31: #{tpu_custom_call.1} parent=1 // pred_check_branch
      %261 = sbr.rel (%p259) target = $region33
    $region32: #{tpu_custom_call.1} parent=1 // pred_region
      %v262 = vld [vmem:[#allocation2] sm:$0xff]
      %v263 = vld [vmem:[#allocation2 + $0x8] sm:$0xff]
      %v264 = vld [vmem:[#allocation2 + $0x10] sm:$0xff]
      %v265 = vld [vmem:[#allocation2 + $0x18] sm:$0xff]
      %v266 = vsel %vm254, %v262, 0.0
      %v267 = vsel %vm254, %v263, 0.0
      %v268 = vadd.f32 %v266, %v267
      %v269 = vsel %vm254, %v264, 0.0
      %v270 = vadd.f32 %v268, %v269
      %v271 = vsel %vm254, %v265, 0.0
      %v272 = vadd.f32 %v270, %v271
      %v273 = vrot.slane %v272, 4
      %v274 = vadd.f32 %v272, %v273
      %v275 = vrot.slane %v274, 2
      %v276 = vadd.f32 %v274, %v275
      %v277 = vrot.slane %v276, 1
      %v278 = vadd.f32 %v276, %v277
      %280 = vset.pattern.permute.xlu0 0
      %281 = vperm.xlu0 %280, %v278
      %v282 = vpop.permute.xlu0 %281
      %284 = vst [vmem:[#allocation6] sm:$0xff] %v282
    $region33: #{tpu_custom_call.1} parent=1 // pred_fallthru
      _
    // Predicated region
    $region34: #{tpu_custom_call.1} parent=1 // pred_check
      _
    $region35: #{tpu_custom_call.1} parent=1 // pred_check_branch
      %286 = sbr.rel (0) target = $region37
    $region36: #{tpu_custom_call.1} parent=1 // pred_region
      %s288 = ssub.s32 128, 128
      %289 = vsyncadd [#allocation5], %s288
      %s291 = sshll.u32 [#allocation6], 4
      %s292 = int_to_ptr.vmem [resolvable:$true] %s291
      %294 = dma.vmem_to_hbm [thread:$0]  %s292, 128, %s5, [#allocation5]
    $region37: #{tpu_custom_call.1} parent=1 // pred_fallthru
      _
    // Predicated region
    $region38: #{tpu_custom_call.1} parent=1 // pred_check
      _
    $region39: #{tpu_custom_call.1} parent=1 // pred_check_branch
      %296 = sbr.rel (0) target = $region41
    $region40: #{tpu_custom_call.1} parent=1 // pred_region
      %297 = dma.done [#allocation5], 128
    $region41: #{tpu_custom_call.1} parent=1 // pred_fallthru
      _
    %298 = vsyncpa [#allocation4], 1
    %299 = vsyncpa [#allocation5], 1

</llo_original>
